<compile_context>
chip_gen: v7x
topology: tpu7x:2x2x1
jax: 0.10.0
libtpu: 0.0.40
codegen_flags: <defaults>
</compile_context>

<pallas_src>
import functools

import jax
import jax.numpy as jnp
from jax import lax
from jax.experimental import pallas as pl
from jax.experimental.pallas import tpu as pltpu


def _round_up(a, b):
    return (a + b - 1) // b * b


def dense_classifier_kernel(x_ref, w0t_ref, b0_ref, w1t_ref, b1_ref, o_ref,
                            *, chunk, n_chunks, b_blk):
    # x_ref:   (B_blk, C_in, TN)  pixels-on-lanes slabs of B_blk images
    # w0t_ref: (H0, C_in) bf16    conv0 weight^T with 1/std folded in
    # b0_ref:  (H0, 1)    f32     conv0 bias with -(mean/std)@w0 folded in
    # w1t_ref: (NC, H0)   bf16    conv1 weight^T
    # b1_ref:  (NC, 1)    f32
    # o_ref:   (B_blk, NC, TN)    log-softmax over classes (sublane axis)

    # Resident blocks: load once per grid step, no per-chunk casts.
    w0t = w0t_ref[...]          # bf16
    w1t = w1t_ref[...]          # bf16
    b0 = b0_ref[...]            # (H0, 1) f32 column, broadcast in the epilogue add
    b1 = b1_ref[...]            # (NC, 1) f32 column

    for b in range(b_blk):      # static, cheap per-image views
        def body(c, carry):
            start = pl.multiple_of(c * chunk, 128)
            x = x_ref[b, :, pl.ds(start, chunk)].astype(jnp.bfloat16)   # (C_in, chunk)
            # conv0 (normalization folded into weights/bias) + ReLU
            h = jnp.dot(w0t, x, preferred_element_type=jnp.float32) + b0
            h = jnp.maximum(h, 0.0).astype(jnp.bfloat16)                # (H0, chunk)
            # conv1
            logits = jnp.dot(w1t, h, preferred_element_type=jnp.float32) + b1
            # log_softmax over the class (sublane) axis
            m = jnp.max(logits, axis=0, keepdims=True)
            shifted = logits - m
            lse = jnp.log(jnp.sum(jnp.exp(shifted), axis=0, keepdims=True))
            o_ref[b, :, pl.ds(start, chunk)] = (shifted - lse).astype(o_ref.dtype)
            return carry

        lax.fori_loop(0, n_chunks, body, None, unroll=True)


def dense_classifier_forward(x_nchw, mean, std, w0, b0, w1, b1, *,
                             tn=4096, out_dtype=jnp.float32):
    """DenseClassifier.forward.

    x_nchw : (N, C_in, H, W) float32
    mean, std : (C_in,) per-channel normalization stats
    w0 : (C_in, H0)  conv0 1x1 weight stored as (in, out)  (PyTorch weight.T)
    b0 : (H0,)
    w1 : (H0, NC)    conv1 1x1 weight stored as (in, out)
    b1 : (NC,)
    tn : pixel (lane) budget per grid step; sweep 2048-4096.
    out_dtype : output dtype (float32 matches the PyTorch contract; bfloat16
                cuts HBM traffic on memory-bound v5e/v6e).

    Returns (N, NC, H, W) log-softmax over the class (channel) dim.
    """
    N, C_in, H, W = x_nchw.shape
    H0 = w0.shape[1]
    NC = w1.shape[1]
    P = H * W

    # Fold (x - mean)/std into conv0:
    #   x_n @ w0 + b0 = x @ (w0/std[:,None]) + (b0 - (mean/std) @ w0)
    # Guard against zero / denormal std channels before taking the reciprocal.
    eps = 1e-12
    safe_std = jnp.where(jnp.abs(std) < eps, jnp.full_like(std, eps), std)
    inv_std = 1.0 / safe_std
    # Fold in f32, then pre-cast the weight blocks to bf16 (MXU operands);
    # the bias columns stay f32 and are added on the f32 accumulator.
    w0t = jnp.transpose(w0 * inv_std[:, None]).astype(jnp.bfloat16)      # (H0, C_in)
    b0f = (b0 - (mean * inv_std) @ w0).astype(jnp.float32).reshape(H0, 1)
    w1t = jnp.transpose(w1).astype(jnp.bfloat16)                          # (NC, H0)
    b1f = b1.astype(jnp.float32).reshape(NC, 1)

    # NCHW-native: (N, C_in, H*W) — a free reshape, no transpose.
    x3 = x_nchw.reshape(N, C_in, P)

    # Lane tile: as large as requested but no larger than the (128-padded) image.
    tn_req = max(128, (tn // 128) * 128)
    tn_eff = min(tn_req, _round_up(P, 128))
    chunk = tn_eff
    for cand in (512, 256, 128):
        if tn_eff % cand == 0:
            chunk = cand
            break
    n_chunks = tn_eff // chunk

    # Small-spatial images: pack several per grid step so each step still does
    # ~tn_req pixels of work against the ~0.35us step overhead.
    b_blk = max(1, min(N, tn_req // tn_eff))

    # Pad the pixel axis (and the batch axis when packing) instead of requiring
    # divisibility; padded lanes/images produce finite values and are sliced off.
    P_pad = _round_up(P, tn_eff)
    N_pad = _round_up(N, b_blk)
    if P_pad != P or N_pad != N:
        x3 = jnp.pad(x3, ((0, N_pad - N), (0, 0), (0, P_pad - P)))
    n_tiles = P_pad // tn_eff

    kernel = functools.partial(dense_classifier_kernel,
                               chunk=chunk, n_chunks=n_chunks, b_blk=b_blk)

    out3 = pl.pallas_call(
        kernel,
        out_shape=jax.ShapeDtypeStruct((N_pad, NC, P_pad), out_dtype),
        grid_spec=pltpu.PrefetchScalarGridSpec(
            num_scalar_prefetch=0,
            grid=(N_pad // b_blk, n_tiles),
            in_specs=[
                pl.BlockSpec((b_blk, C_in, tn_eff), lambda n, j: (n, 0, j)),  # x slabs
                pl.BlockSpec((H0, C_in), lambda n, j: (0, 0)),                # w0^T (folded, bf16)
                pl.BlockSpec((H0, 1), lambda n, j: (0, 0)),                   # b0  (folded, f32)
                pl.BlockSpec((NC, H0), lambda n, j: (0, 0)),                  # w1^T (bf16)
                pl.BlockSpec((NC, 1), lambda n, j: (0, 0)),                   # b1  (f32)
            ],
            out_specs=pl.BlockSpec((b_blk, NC, tn_eff), lambda n, j: (n, 0, j)),
        ),
        compiler_params=pltpu.CompilerParams(
            # Both axes independent -> v7x can split them across its 2 TensorCores.
            dimension_semantics=("parallel", "parallel")),
    )(x3, w0t, b0f, w1t, b1f)

    out3 = out3[:N, :, :P]
    return out3.reshape(N, NC, H, W).astype(out_dtype)


def reference_forward(x_nchw, mean, std, w0, b0, w1, b1):
    """Pure-JAX f32 reference with the original (un-folded) math."""
    N, C_in, H, W = x_nchw.shape
    x2d = jnp.transpose(x_nchw, (0, 2, 3, 1)).reshape(-1, C_in)
    x2d = (x2d - mean.reshape(1, -1)) / std.reshape(1, -1)
    h = jnp.maximum(x2d @ w0 + b0.reshape(1, -1), 0.0)
    logits = h @ w1 + b1.reshape(1, -1)
    out = jax.nn.log_softmax(logits, axis=-1)
    NC = w1.shape[1]
    return jnp.transpose(out.reshape(N, H, W, NC), (0, 3, 1, 2))


if __name__ == "__main__":
    # Small synthetic shapes consistent with the module:
    #   fc0_in = 32 (zoomout feature channels), fc0_out = 64, n_classes = 21
    N, C_in, H, W = 2, 32, 16, 16
    H0, NC = 64, 21

    key = jax.random.PRNGKey(0)
    kx, km, ks, kw0, kb0, kw1, kb1 = jax.random.split(key, 7)

    x = jax.random.normal(kx, (N, C_in, H, W), dtype=jnp.float32)
    mean = jax.random.normal(km, (C_in,), dtype=jnp.float32) * 0.1
    std = jax.random.uniform(ks, (C_in,), dtype=jnp.float32, minval=0.5, maxval=1.5)
    # Conv weights stored as (in, out), i.e. PyTorch 1x1 conv weight (out,in,1,1)^T.
    w0 = jax.random.normal(kw0, (C_in, H0), dtype=jnp.float32) * 0.1
    b0 = jax.random.normal(kb0, (H0,), dtype=jnp.float32) * 0.1
    w1 = jax.random.normal(kw1, (H0, NC), dtype=jnp.float32) * 0.1
    b1 = jax.random.normal(kb1, (NC,), dtype=jnp.float32) * 0.1

    # Main case: small-spatial path (images packed per grid step).
    out = jax.block_until_ready(dense_classifier_forward(x, mean, std, w0, b0, w1, b1))
    ref = reference_forward(x, mean, std, w0, b0, w1, b1)
    assert out.shape == (N, NC, H, W)
    err = float(jnp.max(jnp.abs(out - ref)))
    assert err < 5e-2, f"mismatch vs reference, max abs err = {err}"  # bf16 matmul tolerance

    # Ragged spatial size exercises the lane-padding path (H*W not a multiple of 128).
    x2 = jax.random.normal(kx, (N, C_in, 10, 10), dtype=jnp.float32)
    out2 = jax.block_until_ready(dense_classifier_forward(x2, mean, std, w0, b0, w1, b1))
    ref2 = reference_forward(x2, mean, std, w0, b0, w1, b1)
    assert out2.shape == (N, NC, 10, 10)
    assert float(jnp.max(jnp.abs(out2 - ref2))) < 5e-2

    # Odd batch with a small tn exercises the batch-padding path (B_blk=2 over N=3).
    x3 = jax.random.normal(kx, (3, C_in, 16, 16), dtype=jnp.float32)
    out3 = jax.block_until_ready(
        dense_classifier_forward(x3, mean, std, w0, b0, w1, b1, tn=512))
    ref3 = reference_forward(x3, mean, std, w0, b0, w1, b1)
    assert out3.shape == (3, NC, 16, 16)
    assert float(jnp.max(jnp.abs(out3 - ref3))) < 5e-2

    # Larger spatial extent exercises the multi-chunk inner loop (P = 4096).
    x4 = jax.random.normal(kx, (1, C_in, 64, 64), dtype=jnp.float32)
    out4 = jax.block_until_ready(dense_classifier_forward(x4, mean, std, w0, b0, w1, b1))
    ref4 = reference_forward(x4, mean, std, w0, b0, w1, b1)
    assert out4.shape == (1, NC, 64, 64)
    assert float(jnp.max(jnp.abs(out4 - ref4))) < 5e-2

    # TODO(synk): original docstring mentions F.upsample_bilinear to 224x224,
    # but it is not invoked in forward(), so it is intentionally not implemented.
    print("KERNEL_OK")
</pallas_src>

<mosaic_0001>
module attributes {stable_mosaic.version = 11 : i64} {
  func.func @dense_classifier_kernel(%arg0: i32, %arg1: i32, %arg2: memref<2x32x256xf32, #tpu.memory_space<vmem>>, %arg3: memref<64x32xbf16, #tpu.memory_space<vmem>>, %arg4: memref<64x1xf32, #tpu.memory_space<vmem>>, %arg5: memref<21x64xbf16, #tpu.memory_space<vmem>>, %arg6: memref<21x1xf32, #tpu.memory_space<vmem>>, %arg7: memref<2x21x256xf32, #tpu.memory_space<vmem>>) attributes {dimension_semantics = [#tpu.dimension_semantics<parallel>, #tpu.dimension_semantics<parallel>], iteration_bounds = array<i64: 1, 1>, scalar_prefetch = 0 : i64, scratch_operands = 0 : i64, tpu.core_type = #tpu.core_type<tc>, window_params = [{transform_indices = @transform_0, window_bounds = array<i64: 2, 32, 256>}, {pipeline_mode = #tpu.pipeline_mode<synchronous>, transform_indices = @transform_1, window_bounds = array<i64: 64, 32>}, {pipeline_mode = #tpu.pipeline_mode<synchronous>, transform_indices = @transform_2, window_bounds = array<i64: 64, 1>}, {pipeline_mode = #tpu.pipeline_mode<synchronous>, transform_indices = @transform_3, window_bounds = array<i64: 21, 64>}, {pipeline_mode = #tpu.pipeline_mode<synchronous>, transform_indices = @transform_4, window_bounds = array<i64: 21, 1>}, {transform_indices = @transform_5, window_bounds = array<i64: 2, 21, 256>}]} {
    %c0 = arith.constant 0 : index
    %c0_0 = arith.constant 0 : index
    %0 = vector.load %arg3[%c0, %c0_0] : memref<64x32xbf16, #tpu.memory_space<vmem>>, vector<64x32xbf16>
    %c0_1 = arith.constant 0 : index
    %c0_2 = arith.constant 0 : index
    %1 = vector.load %arg5[%c0_1, %c0_2] : memref<21x64xbf16, #tpu.memory_space<vmem>>, vector<21x64xbf16>
    %c0_3 = arith.constant 0 : index
    %c0_4 = arith.constant 0 : index
    %2 = vector.load %arg4[%c0_3, %c0_4] : memref<64x1xf32, #tpu.memory_space<vmem>>, vector<64x1xf32>
    %c0_5 = arith.constant 0 : index
    %c0_6 = arith.constant 0 : index
    %3 = vector.load %arg6[%c0_5, %c0_6] : memref<21x1xf32, #tpu.memory_space<vmem>>, vector<21x1xf32>
    %c0_i32 = arith.constant 0 : i32
    %c256_i32 = arith.constant 256 : i32
    %4 = arith.muli %c0_i32, %c256_i32 : i32
    %5 = tpu.assume_multiple %4, 128 : i32
    %c0_7 = arith.constant 0 : index
    %c0_8 = arith.constant 0 : index
    %6 = arith.index_cast %5 : i32 to index
    %7 = vector.load %arg2[%c0_7, %c0_8, %6] : memref<2x32x256xf32, #tpu.memory_space<vmem>>, vector<1x32x256xf32>
    %8 = vector.shape_cast %7 : vector<1x32x256xf32> to vector<32x256xf32>
    %9 = arith.truncf %8 : vector<32x256xf32> to vector<32x256xbf16>
    %cst = arith.constant dense<0.000000e+00> : vector<64x256xf32>
    %10 = tpu.matmul %0, %9, %cst {dimension_numbers = #tpu.dot_dimension_numbers<[1], [0], [0], [1], [0, 0, 1, 1], [], []>} : vector<64x32xbf16>, vector<32x256xbf16>, vector<64x256xf32> -> vector<64x256xf32>
    %11 = vector.broadcast %2 : vector<64x1xf32> to vector<64x256xf32>
    %12 = arith.addf %10, %11 : vector<64x256xf32>
    %cst_9 = arith.constant 0.000000e+00 : f32
    %13 = vector.broadcast %cst_9 : f32 to vector<64x256xf32>
    %14 = arith.maximumf %12, %13 : vector<64x256xf32>
    %15 = arith.truncf %14 : vector<64x256xf32> to vector<64x256xbf16>
    %cst_10 = arith.constant dense<0.000000e+00> : vector<21x256xf32>
    %16 = tpu.matmul %1, %15, %cst_10 {dimension_numbers = #tpu.dot_dimension_numbers<[1], [0], [0], [1], [0, 0, 1, 1], [], []>} : vector<21x64xbf16>, vector<64x256xbf16>, vector<21x256xf32> -> vector<21x256xf32>
    %17 = vector.broadcast %3 : vector<21x1xf32> to vector<21x256xf32>
    %18 = arith.addf %16, %17 : vector<21x256xf32>
    %cst_11 = arith.constant dense<0xFF800000> : vector<256xf32>
    %19 = vector.multi_reduction <maximumf>, %18, %cst_11 [0] : vector<21x256xf32> to vector<256xf32>
    %20 = vector.shape_cast %19 : vector<256xf32> to vector<1x256xf32>
    %21 = vector.broadcast %20 : vector<1x256xf32> to vector<21x256xf32>
    %22 = arith.subf %18, %21 : vector<21x256xf32>
    %23 = math.exp %22 : vector<21x256xf32>
    %cst_12 = arith.constant dense<0.000000e+00> : vector<256xf32>
    %24 = vector.multi_reduction <add>, %23, %cst_12 [0] : vector<21x256xf32> to vector<256xf32>
    %25 = vector.shape_cast %24 : vector<256xf32> to vector<1x256xf32>
    %26 = math.log %25 : vector<1x256xf32>
    %27 = vector.broadcast %26 : vector<1x256xf32> to vector<21x256xf32>
    %28 = arith.subf %22, %27 : vector<21x256xf32>
    %c0_13 = arith.constant 0 : index
    %c0_14 = arith.constant 0 : index
    %29 = arith.index_cast %5 : i32 to index
    %30 = vector.load %arg7[%c0_13, %c0_14, %29] : memref<2x21x256xf32, #tpu.memory_space<vmem>>, vector<1x21x256xf32>
    %31 = vector.shape_cast %30 : vector<1x21x256xf32> to vector<21x256xf32>
    %32 = vector.shape_cast %28 : vector<21x256xf32> to vector<1x21x256xf32>
    tpu.vector_store %arg7[%c0_13, %c0_14, %29], %32 {strides = array<i32>} : memref<2x21x256xf32, #tpu.memory_space<vmem>>, vector<1x21x256xf32>,
    %c1_i32 = arith.constant 1 : i32
    %c0_i32_15 = arith.constant 0 : i32
    %c256_i32_16 = arith.constant 256 : i32
    %33 = arith.muli %c0_i32_15, %c256_i32_16 : i32
    %34 = tpu.assume_multiple %33, 128 : i32
    %c1 = arith.constant 1 : index
    %c0_17 = arith.constant 0 : index
    %35 = arith.index_cast %34 : i32 to index
    %36 = vector.load %arg2[%c1, %c0_17, %35] : memref<2x32x256xf32, #tpu.memory_space<vmem>>, vector<1x32x256xf32>
    %37 = vector.shape_cast %36 : vector<1x32x256xf32> to vector<32x256xf32>
    %38 = arith.truncf %37 : vector<32x256xf32> to vector<32x256xbf16>
    %cst_18 = arith.constant dense<0.000000e+00> : vector<64x256xf32>
    %39 = tpu.matmul %0, %38, %cst_18 {dimension_numbers = #tpu.dot_dimension_numbers<[1], [0], [0], [1], [0, 0, 1, 1], [], []>} : vector<64x32xbf16>, vector<32x256xbf16>, vector<64x256xf32> -> vector<64x256xf32>
    %40 = vector.broadcast %2 : vector<64x1xf32> to vector<64x256xf32>
    %41 = arith.addf %39, %40 : vector<64x256xf32>
    %cst_19 = arith.constant 0.000000e+00 : f32
    %42 = vector.broadcast %cst_19 : f32 to vector<64x256xf32>
    %43 = arith.maximumf %41, %42 : vector<64x256xf32>
    %44 = arith.truncf %43 : vector<64x256xf32> to vector<64x256xbf16>
    %cst_20 = arith.constant dense<0.000000e+00> : vector<21x256xf32>
    %45 = tpu.matmul %1, %44, %cst_20 {dimension_numbers = #tpu.dot_dimension_numbers<[1], [0], [0], [1], [0, 0, 1, 1], [], []>} : vector<21x64xbf16>, vector<64x256xbf16>, vector<21x256xf32> -> vector<21x256xf32>
    %46 = vector.broadcast %3 : vector<21x1xf32> to vector<21x256xf32>
    %47 = arith.addf %45, %46 : vector<21x256xf32>
    %cst_21 = arith.constant dense<0xFF800000> : vector<256xf32>
    %48 = vector.multi_reduction <maximumf>, %47, %cst_21 [0] : vector<21x256xf32> to vector<256xf32>
    %49 = vector.shape_cast %48 : vector<256xf32> to vector<1x256xf32>
    %50 = vector.broadcast %49 : vector<1x256xf32> to vector<21x256xf32>
    %51 = arith.subf %47, %50 : vector<21x256xf32>
    %52 = math.exp %51 : vector<21x256xf32>
    %cst_22 = arith.constant dense<0.000000e+00> : vector<256xf32>
    %53 = vector.multi_reduction <add>, %52, %cst_22 [0] : vector<21x256xf32> to vector<256xf32>
    %54 = vector.shape_cast %53 : vector<256xf32> to vector<1x256xf32>
    %55 = math.log %54 : vector<1x256xf32>
    %56 = vector.broadcast %55 : vector<1x256xf32> to vector<21x256xf32>
    %57 = arith.subf %51, %56 : vector<21x256xf32>
    %c1_23 = arith.constant 1 : index
    %c0_24 = arith.constant 0 : index
    %58 = arith.index_cast %34 : i32 to index
    %59 = vector.load %arg7[%c1_23, %c0_24, %58] : memref<2x21x256xf32, #tpu.memory_space<vmem>>, vector<1x21x256xf32>
    %60 = vector.shape_cast %59 : vector<1x21x256xf32> to vector<21x256xf32>
    %61 = vector.shape_cast %57 : vector<21x256xf32> to vector<1x21x256xf32>
    tpu.vector_store %arg7[%c1_23, %c0_24, %58], %61 {strides = array<i32>} : memref<2x21x256xf32, #tpu.memory_space<vmem>>, vector<1x21x256xf32>,
    %c1_i32_25 = arith.constant 1 : i32
    return
  }
  func.func @transform_0(%arg0: i32, %arg1: i32) -> (i32, i32, i32) {
    %c0_i32 = arith.constant 0 : i32
    %c0_i32_0 = arith.constant 0 : i32
    return %arg0, %c0_i32, %arg1 : i32, i32, i32
  }
  func.func @transform_1(%arg0: i32, %arg1: i32) -> (i32, i32) {
    %c0_i32 = arith.constant 0 : i32
    %c0_i32_0 = arith.constant 0 : i32
    %c0_i32_1 = arith.constant 0 : i32
    return %c0_i32, %c0_i32_0 : i32, i32
  }
  func.func @transform_2(%arg0: i32, %arg1: i32) -> (i32, i32) {
    %c0_i32 = arith.constant 0 : i32
    %c0_i32_0 = arith.constant 0 : i32
    %c0_i32_1 = arith.constant 0 : i32
    return %c0_i32, %c0_i32_0 : i32, i32
  }
  func.func @transform_3(%arg0: i32, %arg1: i32) -> (i32, i32) {
    %c0_i32 = arith.constant 0 : i32
    %c0_i32_0 = arith.constant 0 : i32
    %c0_i32_1 = arith.constant 0 : i32
    return %c0_i32, %c0_i32_0 : i32, i32
  }
  func.func @transform_4(%arg0: i32, %arg1: i32) -> (i32, i32) {
    %c0_i32 = arith.constant 0 : i32
    %c0_i32_0 = arith.constant 0 : i32
    %c0_i32_1 = arith.constant 0 : i32
    return %c0_i32, %c0_i32_0 : i32, i32
  }
  func.func @transform_5(%arg0: i32, %arg1: i32) -> (i32, i32, i32) {
    %c0_i32 = arith.constant 0 : i32
    %c0_i32_0 = arith.constant 0 : i32
    return %arg0, %c0_i32, %arg1 : i32, i32, i32
  }
}

</mosaic_0001>

<llo_original>
// kernel: tpu_custom_call.1
$region0: #{tpu_custom_call.1}
  #allocation0 [shape = 'u32[]', space=smem, size = 0x4, offset = 0x4, fixed_abs, tag = 'smem constant byte address 0x4 - core index']
  #allocation1 [shape = 'u32[144,128]{1,0:T(1,128)}', space=vmem, size = 0x12000, scoped, tag = 'internal scratch']
  %s0 = inlined_call_operand.vmem [shape: f32[2,32,256], index: 0, kind: input, shape index: {}]
  %s1 = inlined_call_operand.vmem [shape: bf16[64,32], index: 1, kind: input, shape index: {}]
  %s2 = inlined_call_operand.vmem [shape: f32[64,1], index: 2, kind: input, shape index: {}]
  %s3 = inlined_call_operand.vmem [shape: bf16[21,64], index: 3, kind: input, shape index: {}]
  %s4 = inlined_call_operand.vmem [shape: f32[21,1], index: 4, kind: input, shape index: {}]
  %s5 = inlined_call_operand.vmem [shape: f32[2,21,256], index: 5, kind: output, shape index: {}]
  %s6 = sld [smem:[#allocation0]]
  $region30: #{tpu_custom_call.1} parent=0
    _
  %s8 = ssub.s32 1, %s6
  %s9 = scalar_select 0, %s8, %s6
  // Predicated region
  $region2: #{tpu_custom_call.1} parent=0 // pred_check
    _
  $region3: #{tpu_custom_call.1} parent=0 // pred_check_branch
    %11 = sbr.rel (0) target = $region5
  $region4: #{tpu_custom_call.1} parent=0 // pred_region
    _
  $region5: #{tpu_custom_call.1} parent=0 // pred_fallthru
    _
  // Predicated region
  $region6: #{tpu_custom_call.1} parent=0 // pred_check
    _
  $region7: #{tpu_custom_call.1} parent=0 // pred_check_branch
    %13 = sbr.rel (0) target = $region9
  $region8: #{tpu_custom_call.1} parent=0 // pred_region
    _
  $region9: #{tpu_custom_call.1} parent=0 // pred_fallthru
    _
  // Predicated region
  $region10: #{tpu_custom_call.1} parent=0 // pred_check
    _
  $region11: #{tpu_custom_call.1} parent=0 // pred_check_branch
    %15 = sbr.rel (0) target = $region13
  $region12: #{tpu_custom_call.1} parent=0 // pred_region
    _
  $region13: #{tpu_custom_call.1} parent=0 // pred_fallthru
    _
  // Predicated region
  $region14: #{tpu_custom_call.1} parent=0 // pred_check
    _
  $region15: #{tpu_custom_call.1} parent=0 // pred_check_branch
    %17 = sbr.rel (0) target = $region17
  $region16: #{tpu_custom_call.1} parent=0 // pred_region
    _
  $region17: #{tpu_custom_call.1} parent=0 // pred_fallthru
    _
  // Predicated region
  $region18: #{tpu_custom_call.1} parent=0 // pred_check
    _
  $region19: #{tpu_custom_call.1} parent=0 // pred_check_branch
    %19 = sbr.rel (0) target = $region21
  $region20: #{tpu_custom_call.1} parent=0 // pred_region
    _
  $region21: #{tpu_custom_call.1} parent=0 // pred_fallthru
    _
  %v21 = vld [vmem:[%s1] sm:$0xf]
  %v22 = vld [vmem:[%s1 + $0x4] sm:$0xf]
  %v23 = vld [vmem:[%s1 + $0x8] sm:$0xf]
  %v24 = vld [vmem:[%s1 + $0xc] sm:$0xf]
  %v25 = vld [vmem:[%s1 + $0x10] sm:$0xf]
  %v26 = vld [vmem:[%s1 + $0x14] sm:$0xf]
  %v27 = vld [vmem:[%s1 + $0x18] sm:$0xf]
  %v28 = vld [vmem:[%s1 + $0x1c] sm:$0xf]
  %v29 = vld [vmem:[%s3] sm:$0xf]
  %v30 = vld [vmem:[%s3 + $0x4] sm:$0xf]
  %v31 = vld [vmem:[%s3 + $0x8] sm:$0x7]
  %v32 = vld [vmem:[%s2] sm:$0xff]
  %v33 = vld [vmem:[%s2 + $0x8] sm:$0xff]
  %v34 = vld [vmem:[%s2 + $0x10] sm:$0xff]
  %v35 = vld [vmem:[%s2 + $0x18] sm:$0xff]
  %v36 = vld [vmem:[%s2 + $0x20] sm:$0xff]
  %v37 = vld [vmem:[%s2 + $0x28] sm:$0xff]
  %v38 = vld [vmem:[%s2 + $0x30] sm:$0xff]
  %v39 = vld [vmem:[%s2 + $0x38] sm:$0xff]
  %v40 = vld [vmem:[%s4] sm:$0xff]
  %v41 = vld [vmem:[%s4 + $0x8] sm:$0xff]
  %v42 = vld [vmem:[%s4 + $0x10] sm:$0x1f]
  %v43 = vld [vmem:[%s0] sm:$0xff]
  %v44 = vld [vmem:[%s0 + $0x8] sm:$0xff]
  %v45 = vld [vmem:[%s0 + $0x10] sm:$0xff]
  %v46 = vld [vmem:[%s0 + $0x18] sm:$0xff]
  %v47 = vld [vmem:[%s0 + $0x20] sm:$0xff]
  %v48 = vld [vmem:[%s0 + $0x28] sm:$0xff]
  %v49 = vld [vmem:[%s0 + $0x30] sm:$0xff]
  %v50 = vld [vmem:[%s0 + $0x38] sm:$0xff]
  %v51 = vpack.c.bf16 %v45, %v43
  %v52 = vpack.c.bf16 %v46, %v44
  %v53 = vpack.c.bf16 %v49, %v47
  %v54 = vpack.c.bf16 %v50, %v48
  %56 = vset.pattern.permute.xlu0 0
  %57 = vperm.xlu0 %56, %v32
  %v58 = vpop.permute.xlu0 %57
  %61 = vset.pattern.permute.xlu0 0
  %62 = vperm.xlu0 %61, %v33
  %v63 = vpop.permute.xlu0 %62
  %66 = vset.pattern.permute.xlu0 0
  %67 = vperm.xlu0 %66, %v34
  %v68 = vpop.permute.xlu0 %67
  %71 = vset.pattern.permute.xlu0 0
  %72 = vperm.xlu0 %71, %v35
  %v73 = vpop.permute.xlu0 %72
  %76 = vset.pattern.permute.xlu0 0
  %77 = vperm.xlu0 %76, %v36
  %v78 = vpop.permute.xlu0 %77
  %81 = vset.pattern.permute.xlu0 0
  %82 = vperm.xlu0 %81, %v37
  %v83 = vpop.permute.xlu0 %82
  %86 = vset.pattern.permute.xlu0 0
  %87 = vperm.xlu0 %86, %v38
  %v88 = vpop.permute.xlu0 %87
  %91 = vset.pattern.permute.xlu0 0
  %92 = vperm.xlu0 %91, %v39
  %v93 = vpop.permute.xlu0 %92
  %v103 = vunpack.c.l.b16 %v21
  %v104 = vunpack.c.l.b16 %v22
  %v105 = vunpack.c.l.b16 %v23
  %v106 = vunpack.c.l.b16 %v24
  %v107 = vunpack.c.l.b16 %v25
  %v108 = vunpack.c.l.b16 %v26
  %v109 = vunpack.c.l.b16 %v27
  %v110 = vunpack.c.l.b16 %v28
  %v111 = vpack.c.b16 %v104, %v103
  %v112 = vpack.c.b16 %v106, %v105
  %v113 = vpack.c.b16 %v108, %v107
  %v114 = vpack.c.b16 %v110, %v109
  %vm115 = vcmask 261120
  %v117 = vsel %vm115, %v111, 0
  %v120 = vsel %vm115, %v112, 0
  %v123 = vsel %vm115, %v113, 0
  %v126 = vsel %vm115, %v114, 0
  %128 = vmatprep.subr.bf16.mxu0 %v52
  %129 = vmatpush1.bf16.msra.mxu0 %v51
  %130 = vmatprep.subr.bf16.mxu0 %v54
  %131 = vmatpush1.bf16.msra.mxu0 %v53
  %132 = vmatprep.subr.bf16.mxu0 0
  %133 = vmatpush1.bf16.msra.mxu0 0
  %134 = vmatprep.subr.bf16.mxu0 0
  %135 = vmatpush1.bf16.msra.mxu0 0
  %136 = vmatprep.subr.bf16.mxu0 0
  %137 = vmatpush1.bf16.msra.mxu0 0
  %138 = vmatprep.subr.bf16.mxu0 0
  %139 = vmatpush1.bf16.msra.mxu0 0
  %140 = vmatprep.subr.bf16.mxu0 0
  %141 = vmatpush1.bf16.msra.mxu0 0
  %142 = vmatprep.subr.bf16.mxu0 0
  %143 = vmatpush1.bf16.msra.mxu0 0
  %144 = vmatprep.subr.bf16.mxu0 0
  %145 = vmatpush1.bf16.msra.mxu0 0
  %146 = vmatprep.subr.bf16.mxu0 0
  %147 = vmatpush1.bf16.msra.mxu0 0
  %148 = vmatprep.subr.bf16.mxu0 0
  %149 = vmatpush1.bf16.msra.mxu0 0
  %150 = vmatprep.subr.bf16.mxu0 0
  %151 = vmatpush1.bf16.msra.mxu0 0
  %152 = vmatprep.subr.bf16.mxu0 0
  %153 = vmatpush1.bf16.msra.mxu0 0
  %154 = vmatprep.subr.bf16.mxu0 0
  %155 = vmatpush1.bf16.msra.mxu0 0
  %156 = vmatprep.subr.bf16.mxu0 0
  %157 = vmatpush1.bf16.msra.mxu0 0
  %158 = vmatprep.subr.bf16.mxu0 0
  %159 = vmatpush1.bf16.msra.mxu0 0
  %160 = vmatprep.mubr.bf16.mxu0 0
  %161 = vmatmul.mubr.bf16.gmra.mrb[0].mxu0 %v117
  %v162 = vpop.f32.mrb[0].mxu0
  %v163 = vadd.f32 %v58, %v162
  %v164 = vpop.f32.mrb[0].mxu0
  %v165 = vadd.f32 %v58, %v164
  %v166 = vpop.f32.mrb[0].mxu0
  %v167 = vadd.f32 %v63, %v166
  %v168 = vpop.f32.mrb[0].mxu0
  %v169 = vadd.f32 %v63, %v168
  %170 = vmatprep.mubr.bf16.mxu0 0
  %171 = vmatmul.mubr.bf16.gmra.mrb[0].mxu0 %v120
  %v172 = vpop.f32.mrb[0].mxu0
  %v173 = vadd.f32 %v68, %v172
  %v174 = vpop.f32.mrb[0].mxu0
  %v175 = vadd.f32 %v68, %v174
  %v176 = vpop.f32.mrb[0].mxu0
  %v177 = vadd.f32 %v73, %v176
  %v178 = vpop.f32.mrb[0].mxu0
  %v179 = vadd.f32 %v73, %v178
  %180 = vmatprep.mubr.bf16.mxu0 0
  %181 = vmatmul.mubr.bf16.gmra.mrb[0].mxu0 %v123
  %v182 = vpop.f32.mrb[0].mxu0
  %v183 = vadd.f32 %v78, %v182
  %v184 = vpop.f32.mrb[0].mxu0
  %v185 = vadd.f32 %v78, %v184
  %v186 = vpop.f32.mrb[0].mxu0
  %v187 = vadd.f32 %v83, %v186
  %v188 = vpop.f32.mrb[0].mxu0
  %v189 = vadd.f32 %v83, %v188
  %190 = vmatprep.mubr.bf16.mxu0 0
  %191 = vmatmul.mubr.bf16.gmra.mrb[0].mxu0 %v126
  %v192 = vpop.f32.mrb[0].mxu0
  %v193 = vadd.f32 %v88, %v192
  %v194 = vpop.f32.mrb[0].mxu0
  %v195 = vadd.f32 %v88, %v194
  %v196 = vpop.f32.mrb[0].mxu0
  %v197 = vadd.f32 %v93, %v196
  %v198 = vpop.f32.mrb[0].mxu0
  %v199 = vadd.f32 %v93, %v198
  %200 = vdwg.mxu0
  %v201 = vmax.f32 %v163, 0.0
  %v202 = vmax.f32 %v165, 0.0
  %v203 = vmax.f32 %v167, 0.0
  %v204 = vmax.f32 %v169, 0.0
  %v205 = vmax.f32 %v173, 0.0
  %v206 = vmax.f32 %v175, 0.0
  %v207 = vmax.f32 %v177, 0.0
  %v208 = vmax.f32 %v179, 0.0
  %v209 = vmax.f32 %v183, 0.0
  %v210 = vmax.f32 %v185, 0.0
  %v211 = vmax.f32 %v187, 0.0
  %v212 = vmax.f32 %v189, 0.0
  %v213 = vmax.f32 %v193, 0.0
  %v214 = vmax.f32 %v195, 0.0
  %v215 = vmax.f32 %v197, 0.0
  %v216 = vmax.f32 %v199, 0.0
  %v217 = vpack.c.bf16 %v203, %v201
  %v218 = vpack.c.bf16 %v204, %v202
  %v219 = vpack.c.bf16 %v207, %v205
  %v220 = vpack.c.bf16 %v208, %v206
  %v221 = vpack.c.bf16 %v211, %v209
  %v222 = vpack.c.bf16 %v212, %v210
  %v223 = vpack.c.bf16 %v215, %v213
  %v224 = vpack.c.bf16 %v216, %v214
  %226 = vset.pattern.permute.xlu0 0
  %227 = vperm.xlu0 %226, %v40
  %v228 = vpop.permute.xlu0 %227
  %231 = vset.pattern.permute.xlu0 0
  %232 = vperm.xlu0 %231, %v41
  %v233 = vpop.permute.xlu0 %232
  %236 = vset.pattern.permute.xlu0 0
  %237 = vperm.xlu0 %236, %v42
  %v238 = vpop.permute.xlu0 %237
  %v243 = vunpack.c.l.b16 %v29
  %v244 = vunpack.c.l.b16 %v30
  %v245 = vunpack.c.l.b16 %v31
  %v246 = vpack.c.b16 %v244, %v243
  %v247 = vpack.c.b16 %v245, %v245
  %vm248 = vcmask 523264
  %v250 = vsel %vm248, %v246, 0
  %v253 = vsel %vm248, %v247, 0
  %255 = vmatprep.subr.bf16.mxu0 %v218
  %256 = vmatpush1.bf16.msra.mxu0 %v217
  %257 = vmatprep.subr.bf16.mxu0 %v220
  %258 = vmatpush1.bf16.msra.mxu0 %v219
  %259 = vmatprep.subr.bf16.mxu0 %v222
  %260 = vmatpush1.bf16.msra.mxu0 %v221
  %261 = vmatprep.subr.bf16.mxu0 %v224
  %262 = vmatpush1.bf16.msra.mxu0 %v223
  %263 = vmatprep.subr.bf16.mxu0 0
  %264 = vmatpush1.bf16.msra.mxu0 0
  %265 = vmatprep.subr.bf16.mxu0 0
  %266 = vmatpush1.bf16.msra.mxu0 0
  %267 = vmatprep.subr.bf16.mxu0 0
  %268 = vmatpush1.bf16.msra.mxu0 0
  %269 = vmatprep.subr.bf16.mxu0 0
  %270 = vmatpush1.bf16.msra.mxu0 0
  %271 = vmatprep.subr.bf16.mxu0 0
  %272 = vmatpush1.bf16.msra.mxu0 0
  %273 = vmatprep.subr.bf16.mxu0 0
  %274 = vmatpush1.bf16.msra.mxu0 0
  %275 = vmatprep.subr.bf16.mxu0 0
  %276 = vmatpush1.bf16.msra.mxu0 0
  %277 = vmatprep.subr.bf16.mxu0 0
  %278 = vmatpush1.bf16.msra.mxu0 0
  %279 = vmatprep.subr.bf16.mxu0 0
  %280 = vmatpush1.bf16.msra.mxu0 0
  %281 = vmatprep.subr.bf16.mxu0 0
  %282 = vmatpush1.bf16.msra.mxu0 0
  %283 = vmatprep.subr.bf16.mxu0 0
  %284 = vmatpush1.bf16.msra.mxu0 0
  %285 = vmatprep.subr.bf16.mxu0 0
  %286 = vmatpush1.bf16.msra.mxu0 0
  %287 = vmatprep.mubr.bf16.mxu0 0
  %288 = vmatmul.mubr.bf16.gmra.mrb[0].mxu0 %v250
  %v289 = vpop.f32.mrb[0].mxu0
  %v290 = vadd.f32 %v228, %v289
  %v291 = vpop.f32.mrb[0].mxu0
  %v292 = vadd.f32 %v228, %v291
  %v293 = vpop.f32.mrb[0].mxu0
  %v294 = vadd.f32 %v233, %v293
  %v295 = vpop.f32.mrb[0].mxu0
  %v296 = vadd.f32 %v233, %v295
  %297 = vmatprep.mubr.bf16.mxu0 0
  %298 = vmatmul.mubr.bf16.gmra.mrb[0].mxu0 %v253
  %v299 = vpop.f32.mrb[0].mxu0
  %v300 = vadd.f32 %v238, %v299
  %v301 = vpop.f32.mrb[0].mxu0
  %v302 = vadd.f32 %v238, %v301
  %v303 = vpop.f32.mrb[0].mxu0
  %v304 = vpop.f32.mrb[0].mxu0
  %305 = vdwg.mxu0
  %vm306 = vcmask 1044480
  %v307 = vsel %vm306, %v300, -inf
  %v308 = vmax.f32 %v290, %v307
  %v309 = vmax.f32 %v308, %v294
  %v310 = vrot.slane %v309, 4
  %v311 = vmax.f32 %v309, %v310
  %v312 = vrot.slane %v311, 2
  %v313 = vmax.f32 %v311, %v312
  %v314 = vrot.slane %v313, 1
  %v315 = vmax.f32 %v313, %v314
  %v316 = vsel %vm306, %v302, -inf
  %v317 = vmax.f32 %v292, %v316
  %v318 = vmax.f32 %v317, %v296
  %v319 = vrot.slane %v318, 4
  %v320 = vmax.f32 %v318, %v319
  %v321 = vrot.slane %v320, 2
  %v322 = vmax.f32 %v320, %v321
  %v323 = vrot.slane %v322, 1
  %v324 = vmax.f32 %v322, %v323
  %v325 = vsub.f32 %v290, %v315
  %v326 = vsub.f32 %v292, %v324
  %v327 = vsub.f32 %v294, %v315
  %v328 = vsub.f32 %v296, %v324
  %v329 = vsub.f32 %v300, %v315
  %v330 = vsub.f32 %v302, %v324
  %v331 = vmul.f32 %v325, 1.442695
  %v332 = vpow.pop %v331
  %v333 = vmul.f32 %v326, 1.442695
  %v334 = vpow.pop %v333
  %v335 = vmul.f32 %v327, 1.442695
  %v336 = vpow.pop %v335
  %v337 = vmul.f32 %v328, 1.442695
  %v338 = vpow.pop %v337
  %v339 = vmul.f32 %v329, 1.442695
  %v340 = vpow.pop %v339
  %v341 = vmul.f32 %v330, 1.442695
  %v342 = vpow.pop %v341
  %v343 = vadd.f32 %v332, %v336
  %v344 = vsel %vm306, %v340, 0.0
  %v345 = vadd.f32 %v343, %v344
  %v346 = vrot.slane %v345, 4
  %v347 = vadd.f32 %v345, %v346
  %v348 = vrot.slane %v347, 2
  %v349 = vadd.f32 %v347, %v348
  %v350 = vrot.slane %v349, 1
  %v351 = vadd.f32 %v349, %v350
  %v352 = vadd.f32 %v334, %v338
  %v353 = vsel %vm306, %v342, 0.0
  %v354 = vadd.f32 %v352, %v353
  %v355 = vrot.slane %v354, 4
  %v356 = vadd.f32 %v354, %v355
  %v357 = vrot.slane %v356, 2
  %v358 = vadd.f32 %v356, %v357
  %v359 = vrot.slane %v358, 1
  %v360 = vadd.f32 %v358, %v359
  %v361 = vlog2.pop %v351
  %v362 = vmul.f32 %v361, 0.6931472
  %v363 = vlog2.pop %v360
  %v364 = vmul.f32 %v363, 0.6931472
  %v365 = vsub.f32 %v325, %v362
  %v366 = vsub.f32 %v326, %v364
  %v367 = vsub.f32 %v327, %v362
  %v368 = vsub.f32 %v328, %v364
  %v369 = vsub.f32 %v329, %v362
  %v370 = vsub.f32 %v330, %v364
  %371 = vst [vmem:[%s5] sm:$0xff] %v365
  %372 = vst [vmem:[%s5 + $0x8] sm:$0xff] %v366
  %373 = vst [vmem:[%s5 + $0x10] sm:$0xff] %v367
  %374 = vst [vmem:[%s5 + $0x18] sm:$0xff] %v368
  %375 = vst [vmem:[%s5 + $0x20] sm:$0x1f] %v369
  %376 = vst [vmem:[%s5 + $0x28] sm:$0x1f] %v370
  %s377 = sadd.s32 0, 8
  %s378 = smul.addr %s377, 8
  %s379 = scalar_lea.vmem %s0, %s378
  %v380 = vld [vmem:[%s379] sm:$0xff]
  %v381 = vld [vmem:[%s379 + $0x8] sm:$0xff]
  %v382 = vld [vmem:[%s379 + $0x10] sm:$0xff]
  %v383 = vld [vmem:[%s379 + $0x18] sm:$0xff]
  %v384 = vld [vmem:[%s379 + $0x20] sm:$0xff]
  %v385 = vld [vmem:[%s379 + $0x28] sm:$0xff]
  %v386 = vld [vmem:[%s379 + $0x30] sm:$0xff]
  %v387 = vld [vmem:[%s379 + $0x38] sm:$0xff]
  %v388 = vpack.c.bf16 %v382, %v380
  %v389 = vpack.c.bf16 %v383, %v381
  %v390 = vpack.c.bf16 %v386, %v384
  %v391 = vpack.c.bf16 %v387, %v385
  %392 = vmatprep.subr.bf16.mxu0 %v389
  %393 = vmatpush1.bf16.msra.mxu0 %v388
  %394 = vmatprep.subr.bf16.mxu0 %v391
  %395 = vmatpush1.bf16.msra.mxu0 %v390
  %396 = vmatprep.subr.bf16.mxu0 0
  %397 = vmatpush1.bf16.msra.mxu0 0
  %398 = vmatprep.subr.bf16.mxu0 0
  %399 = vmatpush1.bf16.msra.mxu0 0
  %400 = vmatprep.subr.bf16.mxu0 0
  %401 = vmatpush1.bf16.msra.mxu0 0
  %402 = vmatprep.subr.bf16.mxu0 0
  %403 = vmatpush1.bf16.msra.mxu0 0
  %404 = vmatprep.subr.bf16.mxu0 0
  %405 = vmatpush1.bf16.msra.mxu0 0
  %406 = vmatprep.subr.bf16.mxu0 0
  %407 = vmatpush1.bf16.msra.mxu0 0
  %408 = vmatprep.subr.bf16.mxu0 0
  %409 = vmatpush1.bf16.msra.mxu0 0
  %410 = vmatprep.subr.bf16.mxu0 0
  %411 = vmatpush1.bf16.msra.mxu0 0
  %412 = vmatprep.subr.bf16.mxu0 0
  %413 = vmatpush1.bf16.msra.mxu0 0
  %414 = vmatprep.subr.bf16.mxu0 0
  %415 = vmatpush1.bf16.msra.mxu0 0
  %416 = vmatprep.subr.bf16.mxu0 0
  %417 = vmatpush1.bf16.msra.mxu0 0
  %418 = vmatprep.subr.bf16.mxu0 0
  %419 = vmatpush1.bf16.msra.mxu0 0
  %420 = vmatprep.subr.bf16.mxu0 0
  %421 = vmatpush1.bf16.msra.mxu0 0
  %422 = vmatprep.subr.bf16.mxu0 0
  %423 = vmatpush1.bf16.msra.mxu0 0
  %424 = vmatprep.mubr.bf16.mxu0 0
  %425 = vmatmul.mubr.bf16.gmra.mrb[0].mxu0 %v117
  %v426 = vpop.f32.mrb[0].mxu0
  %v427 = vadd.f32 %v58, %v426
  %v428 = vpop.f32.mrb[0].mxu0
  %v429 = vadd.f32 %v58, %v428
  %v430 = vpop.f32.mrb[0].mxu0
  %v431 = vadd.f32 %v63, %v430
  %v432 = vpop.f32.mrb[0].mxu0
  %v433 = vadd.f32 %v63, %v432
  %434 = vmatprep.mubr.bf16.mxu0 0
  %435 = vmatmul.mubr.bf16.gmra.mrb[0].mxu0 %v120
  %v436 = vpop.f32.mrb[0].mxu0
  %v437 = vadd.f32 %v68, %v436
  %v438 = vpop.f32.mrb[0].mxu0
  %v439 = vadd.f32 %v68, %v438
  %v440 = vpop.f32.mrb[0].mxu0
  %v441 = vadd.f32 %v73, %v440
  %v442 = vpop.f32.mrb[0].mxu0
  %v443 = vadd.f32 %v73, %v442
  %444 = vmatprep.mubr.bf16.mxu0 0
  %445 = vmatmul.mubr.bf16.gmra.mrb[0].mxu0 %v123
  %v446 = vpop.f32.mrb[0].mxu0
  %v447 = vadd.f32 %v78, %v446
  %v448 = vpop.f32.mrb[0].mxu0
  %v449 = vadd.f32 %v78, %v448
  %v450 = vpop.f32.mrb[0].mxu0
  %v451 = vadd.f32 %v83, %v450
  %v452 = vpop.f32.mrb[0].mxu0
  %v453 = vadd.f32 %v83, %v452
  %454 = vmatprep.mubr.bf16.mxu0 0
  %455 = vmatmul.mubr.bf16.gmra.mrb[0].mxu0 %v126
  %v456 = vpop.f32.mrb[0].mxu0
  %v457 = vadd.f32 %v88, %v456
  %v458 = vpop.f32.mrb[0].mxu0
  %v459 = vadd.f32 %v88, %v458
  %v460 = vpop.f32.mrb[0].mxu0
  %v461 = vadd.f32 %v93, %v460
  %v462 = vpop.f32.mrb[0].mxu0
  %v463 = vadd.f32 %v93, %v462
  %464 = vdwg.mxu0
  %v465 = vmax.f32 %v427, 0.0
  %v466 = vmax.f32 %v429, 0.0
  %v467 = vmax.f32 %v431, 0.0
  %v468 = vmax.f32 %v433, 0.0
  %v469 = vmax.f32 %v437, 0.0
  %v470 = vmax.f32 %v439, 0.0
  %v471 = vmax.f32 %v441, 0.0
  %v472 = vmax.f32 %v443, 0.0
  %v473 = vmax.f32 %v447, 0.0
  %v474 = vmax.f32 %v449, 0.0
  %v475 = vmax.f32 %v451, 0.0
  %v476 = vmax.f32 %v453, 0.0
  %v477 = vmax.f32 %v457, 0.0
  %v478 = vmax.f32 %v459, 0.0
  %v479 = vmax.f32 %v461, 0.0
  %v480 = vmax.f32 %v463, 0.0
  %v481 = vpack.c.bf16 %v467, %v465
  %v482 = vpack.c.bf16 %v468, %v466
  %v483 = vpack.c.bf16 %v471, %v469
  %v484 = vpack.c.bf16 %v472, %v470
  %v485 = vpack.c.bf16 %v475, %v473
  %v486 = vpack.c.bf16 %v476, %v474
  %v487 = vpack.c.bf16 %v479, %v477
  %v488 = vpack.c.bf16 %v480, %v478
  %489 = vmatprep.subr.bf16.mxu0 %v482
  %490 = vmatpush1.bf16.msra.mxu0 %v481
  %491 = vmatprep.subr.bf16.mxu0 %v484
  %492 = vmatpush1.bf16.msra.mxu0 %v483
  %493 = vmatprep.subr.bf16.mxu0 %v486
  %494 = vmatpush1.bf16.msra.mxu0 %v485
  %495 = vmatprep.subr.bf16.mxu0 %v488
  %496 = vmatpush1.bf16.msra.mxu0 %v487
  %497 = vmatprep.subr.bf16.mxu0 0
  %498 = vmatpush1.bf16.msra.mxu0 0
  %499 = vmatprep.subr.bf16.mxu0 0
  %500 = vmatpush1.bf16.msra.mxu0 0
  %501 = vmatprep.subr.bf16.mxu0 0
  %502 = vmatpush1.bf16.msra.mxu0 0
  %503 = vmatprep.subr.bf16.mxu0 0
  %504 = vmatpush1.bf16.msra.mxu0 0
  %505 = vmatprep.subr.bf16.mxu0 0
  %506 = vmatpush1.bf16.msra.mxu0 0
  %507 = vmatprep.subr.bf16.mxu0 0
  %508 = vmatpush1.bf16.msra.mxu0 0
  %509 = vmatprep.subr.bf16.mxu0 0
  %510 = vmatpush1.bf16.msra.mxu0 0
  %511 = vmatprep.subr.bf16.mxu0 0
  %512 = vmatpush1.bf16.msra.mxu0 0
  %513 = vmatprep.subr.bf16.mxu0 0
  %514 = vmatpush1.bf16.msra.mxu0 0
  %515 = vmatprep.subr.bf16.mxu0 0
  %516 = vmatpush1.bf16.msra.mxu0 0
  %517 = vmatprep.subr.bf16.mxu0 0
  %518 = vmatpush1.bf16.msra.mxu0 0
  %519 = vmatprep.subr.bf16.mxu0 0
  %520 = vmatpush1.bf16.msra.mxu0 0
  %521 = vmatprep.mubr.bf16.mxu0 0
  %522 = vmatmul.mubr.bf16.gmra.mrb[0].mxu0 %v250
  %v523 = vpop.f32.mrb[0].mxu0
  %v524 = vadd.f32 %v228, %v523
  %v525 = vpop.f32.mrb[0].mxu0
  %v526 = vadd.f32 %v228, %v525
  %v527 = vpop.f32.mrb[0].mxu0
  %v528 = vadd.f32 %v233, %v527
  %v529 = vpop.f32.mrb[0].mxu0
  %v530 = vadd.f32 %v233, %v529
  %531 = vmatprep.mubr.bf16.mxu0 0
  %532 = vmatmul.mubr.bf16.gmra.mrb[0].mxu0 %v253
  %v533 = vpop.f32.mrb[0].mxu0
  %v534 = vadd.f32 %v238, %v533
  %v535 = vpop.f32.mrb[0].mxu0
  %v536 = vadd.f32 %v238, %v535
  %v537 = vpop.f32.mrb[0].mxu0
  %v538 = vpop.f32.mrb[0].mxu0
  %539 = vdwg.mxu0
  %v540 = vsel %vm306, %v534, -inf
  %v541 = vmax.f32 %v524, %v540
  %v542 = vmax.f32 %v541, %v528
  %v543 = vrot.slane %v542, 4
  %v544 = vmax.f32 %v542, %v543
  %v545 = vrot.slane %v544, 2
  %v546 = vmax.f32 %v544, %v545
  %v547 = vrot.slane %v546, 1
  %v548 = vmax.f32 %v546, %v547
  %v549 = vsel %vm306, %v536, -inf
  %v550 = vmax.f32 %v526, %v549
  %v551 = vmax.f32 %v550, %v530
  %v552 = vrot.slane %v551, 4
  %v553 = vmax.f32 %v551, %v552
  %v554 = vrot.slane %v553, 2
  %v555 = vmax.f32 %v553, %v554
  %v556 = vrot.slane %v555, 1
  %v557 = vmax.f32 %v555, %v556
  %v558 = vsub.f32 %v524, %v548
  %v559 = vsub.f32 %v526, %v557
  %v560 = vsub.f32 %v528, %v548
  %v561 = vsub.f32 %v530, %v557
  %v562 = vsub.f32 %v534, %v548
  %v563 = vsub.f32 %v536, %v557
  %v564 = vmul.f32 %v558, 1.442695
  %v565 = vpow.pop %v564
  %v566 = vmul.f32 %v559, 1.442695
  %v567 = vpow.pop %v566
  %v568 = vmul.f32 %v560, 1.442695
  %v569 = vpow.pop %v568
  %v570 = vmul.f32 %v561, 1.442695
  %v571 = vpow.pop %v570
  %v572 = vmul.f32 %v562, 1.442695
  %v573 = vpow.pop %v572
  %v574 = vmul.f32 %v563, 1.442695
  %v575 = vpow.pop %v574
  %v576 = vadd.f32 %v565, %v569
  %v577 = vsel %vm306, %v573, 0.0
  %v578 = vadd.f32 %v576, %v577
  %v579 = vrot.slane %v578, 4
  %v580 = vadd.f32 %v578, %v579
  %v581 = vrot.slane %v580, 2
  %v582 = vadd.f32 %v580, %v581
  %v583 = vrot.slane %v582, 1
  %v584 = vadd.f32 %v582, %v583
  %v585 = vadd.f32 %v567, %v571
  %v586 = vsel %vm306, %v575, 0.0
  %v587 = vadd.f32 %v585, %v586
  %v588 = vrot.slane %v587, 4
  %v589 = vadd.f32 %v587, %v588
  %v590 = vrot.slane %v589, 2
  %v591 = vadd.f32 %v589, %v590
  %v592 = vrot.slane %v591, 1
  %v593 = vadd.f32 %v591, %v592
  %v594 = vlog2.pop %v584
  %v595 = vmul.f32 %v594, 0.6931472
  %v596 = vlog2.pop %v593
  %v597 = vmul.f32 %v596, 0.6931472
  %v598 = vsub.f32 %v558, %v595
  %v599 = vsub.f32 %v559, %v597
  %v600 = vsub.f32 %v560, %v595
  %v601 = vsub.f32 %v561, %v597
  %v602 = vsub.f32 %v562, %v595
  %v603 = vsub.f32 %v563, %v597
  %s604 = sadd.s32 0, 6
  %s605 = smul.addr %s604, 8
  %s606 = scalar_lea.vmem %s5, %s605
  %607 = vst [vmem:[%s606] sm:$0xff] %v598
  %608 = vst [vmem:[%s606 + $0x8] sm:$0xff] %v599
  %609 = vst [vmem:[%s606 + $0x10] sm:$0xff] %v600
  %610 = vst [vmem:[%s606 + $0x18] sm:$0xff] %v601
  %611 = vst [vmem:[%s606 + $0x20] sm:$0x1f] %v602
  %612 = vst [vmem:[%s606 + $0x28] sm:$0x1f] %v603
  // Predicated region
  $region22: #{tpu_custom_call.1} parent=0 // pred_check
    _
  $region23: #{tpu_custom_call.1} parent=0 // pred_check_branch
    %614 = sbr.rel (0) target = $region25
  $region24: #{tpu_custom_call.1} parent=0 // pred_region
    _
  $region25: #{tpu_custom_call.1} parent=0 // pred_fallthru
    _
  // Predicated region
  $region26: #{tpu_custom_call.1} parent=0 // pred_check
    _
  $region27: #{tpu_custom_call.1} parent=0 // pred_check_branch
    %616 = sbr.rel (0) target = $region29
  $region28: #{tpu_custom_call.1} parent=0 // pred_region
    _
  $region29: #{tpu_custom_call.1} parent=0 // pred_fallthru
    _

</llo_original>
